<compile_context>
chip_gen: v5e
topology: v5e:2x2
jax: 0.10.0
libtpu: 0.0.40
codegen_flags: <defaults>
</compile_context>

<pallas_src>
import jax
import jax.numpy as jnp
from jax.experimental import pallas as pl
from jax.experimental.pallas import tpu as pltpu


def _random_mixing_kernel(r_ref, x_ref, o_ref):
    # r_ref: [tm, N] slab of rows of R (compute dtype, lanes = tokens n)
    # x_ref: [N, C]  one batch of x      (sublanes = tokens n, lanes = C)
    # o_ref: [tm, C] output rows for this (slab, batch)
    # Contraction dim N sits on R's lanes and x's sublanes -> native MXU
    # orientation, f32 accumulation regardless of the bf16 inputs.
    o_ref[...] = jnp.dot(
        r_ref[...], x_ref[...],
        preferred_element_type=jnp.float32).astype(o_ref.dtype)


def _vmem_budget(frac=0.6, default=40 << 20):
    """Per-chip budget for keeping R resident (v5e/v6e 128 MiB, v7x 64 MiB)."""
    try:
        return int(pltpu.get_tpu_info().vmem_capacity_bytes * frac)
    except Exception:
        return default


def _r_block_spec(tm, n_tokens, resident):
    index_map = lambda m, b: (m, 0)
    if resident:
        # Constant index map -> nothing to double-buffer; halves R's VMEM use.
        try:
            return pl.BlockSpec((tm, n_tokens), index_map,
                                pipeline_mode=pl.Buffered(1))
        except TypeError:   # older Pallas without pipeline_mode on BlockSpec
            pass
    return pl.BlockSpec((tm, n_tokens), index_map)


def random_mixing(x, random_matrix, *, compute_dtype=jnp.bfloat16,
                  max_resident_bytes=None):
    """x: [B, H, W, C], random_matrix: [H*W, H*W] -> [B, H, W, C]."""
    B, H, W, C = x.shape
    N = H * W
    assert random_matrix.shape == (N, N)

    out_dtype = x.dtype
    in_sz = jnp.dtype(compute_dtype).itemsize
    out_sz = jnp.dtype(out_dtype).itemsize

    # Natural layout, reshapes only (free).  In a real network the bf16 casts
    # fuse into the producer / are done once for the frozen parameter R.
    xr = x.reshape(B, N, C).astype(compute_dtype)
    rr = random_matrix.astype(compute_dtype)

    budget = max_resident_bytes if max_resident_bytes is not None else _vmem_budget()

    # ---- choose the row-slab size of R --------------------------------------
    # Whole R resident (read from HBM exactly once, single buffered) if it fits;
    # otherwise [tm, N] slabs (double buffered); x[b] then gets re-read once per
    # slab, which is cheap because x[b] is skinny (C << N).
    whole_need = N * N * in_sz + 2 * N * C * in_sz + 2 * N * C * out_sz
    if whole_need <= budget:
        tm = N
    else:
        denom = 2 * (N * in_sz + C * out_sz)
        rows = (budget - 2 * N * C * in_sz) // denom
        rows = max(int(rows), 8)
        rows = rows - rows % 256 if rows >= 256 else rows - rows % 8
        tm = min(max(rows, 8), N)

    # v7x has 2 TensorCores: make sure the (parallel) grid has >= 2 steps.
    if B == 1 and tm == N and N >= 16:
        tm = min(N, (((N + 1) // 2) + 7) // 8 * 8)

    m_tiles = pl.cdiv(N, tm)
    resident = (tm == N)
    r_bufs = 1 if resident else 2
    vmem_need = (r_bufs * tm * N * in_sz      # R slab(s)
                 + 2 * N * C * in_sz          # x[b] block, double buffered
                 + 2 * tm * C * out_sz)       # out tile, double buffered
    vmem_limit = int(max(vmem_need + (4 << 20), 32 << 20))

    cost = pl.CostEstimate(
        flops=2 * B * N * N * C,
        transcendentals=0,
        bytes_accessed=(N * N * in_sz                     # R read once
                        + m_tiles * B * N * C * in_sz     # x (re-)reads
                        + B * N * C * out_sz))            # output write

    out = pl.pallas_call(
        _random_mixing_kernel,
        out_shape=jax.ShapeDtypeStruct((B, N, C), out_dtype),
        grid_spec=pltpu.PrefetchScalarGridSpec(
            num_scalar_prefetch=0,
            grid=(m_tiles, B),                 # b innermost: R slab stays put,
            in_specs=[                         # x[b] fetched once per slab
                _r_block_spec(tm, N, resident),
                pl.BlockSpec((None, N, C), lambda m, b: (b, 0, 0)),
            ],
            out_specs=pl.BlockSpec((None, tm, C), lambda m, b: (b, m, 0)),
        ),
        compiler_params=pltpu.CompilerParams(
            dimension_semantics=("parallel", "parallel"),
            vmem_limit_bytes=vmem_limit),
        cost_estimate=cost,
    )(rr, xr)

    return out.reshape(B, H, W, C)


def reference(x, random_matrix):
    """Pure-JAX reference matching the PyTorch forward exactly (f32)."""
    B, H, W, C = x.shape
    y = jnp.einsum('mn,bnc->bmc', random_matrix, x.reshape(B, H * W, C))
    return y.reshape(B, H, W, C)


if __name__ == "__main__":
    # RandomMixing(size=(16, 16), emb_dim=64): n_tokens = 256.
    B, H, W, C = 2, 16, 16, 64
    N = H * W

    key = jax.random.PRNGKey(0)
    kx, kr = jax.random.split(key)
    x = jax.random.normal(kx, (B, H, W, C), dtype=jnp.float32)
    # Same construction as the module: softmax(rand(N, N), dim=-1), frozen.
    random_matrix = jax.nn.softmax(
        jax.random.uniform(kr, (N, N), dtype=jnp.float32), axis=-1)

    ref = reference(x, random_matrix)

    # Main path: whole R resident in VMEM.
    out = jax.block_until_ready(random_mixing(x, random_matrix))
    assert out.shape == (B, H, W, C) and out.dtype == x.dtype
    assert jnp.allclose(out, ref, atol=3e-3, rtol=2e-2), \
        f"max abs err {jnp.max(jnp.abs(out - ref))}"

    # Large-N fallback (v7x-safe R row slabs), forced via a tiny VMEM budget.
    out2 = jax.block_until_ready(
        random_mixing(x, random_matrix, max_resident_bytes=200_000))
    assert jnp.allclose(out2, ref, atol=3e-3, rtol=2e-2), \
        f"max abs err (slab path) {jnp.max(jnp.abs(out2 - ref))}"

    print("KERNEL_OK")
</pallas_src>

<mosaic_0001>
module attributes {stable_mosaic.version = 11 : i64} {
  func.func @_random_mixing_kernel(%arg0: i32, %arg1: i32, %arg2: memref<256x256xbf16, #tpu.memory_space<vmem>>, %arg3: memref<1x256x64xbf16, #tpu.memory_space<vmem>>, %arg4: memref<1x256x64xf32, #tpu.memory_space<vmem>>) attributes {dimension_semantics = [#tpu.dimension_semantics<parallel>, #tpu.dimension_semantics<parallel>], iteration_bounds = array<i64: 1, 2>, scalar_prefetch = 0 : i64, scratch_operands = 0 : i64, tpu.core_type = #tpu.core_type<tc>, window_params = [{pipeline_mode = #tpu.pipeline_mode<synchronous>, transform_indices = @transform_0, window_bounds = array<i64: 256, 256>}, {transform_indices = @transform_1, window_bounds = array<i64: 1, 256, 64>}, {transform_indices = @transform_2, window_bounds = array<i64: 1, 256, 64>}]} {
    %c0 = arith.constant 0 : index
    %c0_0 = arith.constant 0 : index
    %0 = vector.load %arg2[%c0, %c0_0] : memref<256x256xbf16, #tpu.memory_space<vmem>>, vector<256x256xbf16>
    %c0_1 = arith.constant 0 : index
    %c0_2 = arith.constant 0 : index
    %c0_3 = arith.constant 0 : index
    %1 = vector.load %arg3[%c0_1, %c0_2, %c0_3] : memref<1x256x64xbf16, #tpu.memory_space<vmem>>, vector<1x256x64xbf16>
    %2 = vector.shape_cast %1 : vector<1x256x64xbf16> to vector<256x64xbf16>
    %cst = arith.constant dense<0.000000e+00> : vector<256x64xf32>
    %3 = tpu.matmul %0, %2, %cst {dimension_numbers = #tpu.dot_dimension_numbers<[1], [0], [0], [1], [0, 0, 1, 1], [], []>} : vector<256x256xbf16>, vector<256x64xbf16>, vector<256x64xf32> -> vector<256x64xf32>
    %c0_4 = arith.constant 0 : index
    %c0_5 = arith.constant 0 : index
    %c0_6 = arith.constant 0 : index
    %4 = vector.load %arg4[%c0_4, %c0_5, %c0_6] : memref<1x256x64xf32, #tpu.memory_space<vmem>>, vector<1x256x64xf32>
    %5 = vector.shape_cast %4 : vector<1x256x64xf32> to vector<256x64xf32>
    %6 = vector.shape_cast %3 : vector<256x64xf32> to vector<1x256x64xf32>
    tpu.vector_store %arg4[%c0_4, %c0_5, %c0_6], %6 {strides = array<i32>} : memref<1x256x64xf32, #tpu.memory_space<vmem>>, vector<1x256x64xf32>,
    return
  }
  func.func @transform_0(%arg0: i32, %arg1: i32) -> (i32, i32) {
    %c0_i32 = arith.constant 0 : i32
    %c0_i32_0 = arith.constant 0 : i32
    return %arg0, %c0_i32 : i32, i32
  }
  func.func @transform_1(%arg0: i32, %arg1: i32) -> (i32, i32, i32) {
    %c0_i32 = arith.constant 0 : i32
    %c0_i32_0 = arith.constant 0 : i32
    %c0_i32_1 = arith.constant 0 : i32
    return %arg1, %c0_i32, %c0_i32_0 : i32, i32, i32
  }
  func.func @transform_2(%arg0: i32, %arg1: i32) -> (i32, i32, i32) {
    %c0_i32 = arith.constant 0 : i32
    %c0_i32_0 = arith.constant 0 : i32
    return %arg1, %arg0, %c0_i32 : i32, i32, i32
  }
}

</mosaic_0001>

<llo_original>
// kernel: tpu_custom_call.1
$region0: #{tpu_custom_call.1}
  #allocation0 [shape = 'u32[]', space=smem, size = 0x4, offset = 0x4, fixed_abs, tag = 'smem constant byte address 0x4 - core index']
  #allocation1 [shape = 'u32[72,128]{1,0:T(1,128)}', space=vmem, size = 0x9000, scoped, tag = 'internal scratch']
  %s0 = inlined_call_operand.vmem [shape: bf16[256,256], index: 0, kind: input, shape index: {}]
  %s1 = inlined_call_operand.vmem [shape: bf16[2,256,64], index: 1, kind: input, shape index: {}]
  %s2 = inlined_call_operand.vmem [shape: f32[2,256,64], index: 2, kind: output, shape index: {}]
  %s3 = sld [smem:[#allocation0]]
  $region41: #{tpu_custom_call.1} parent=0
    _
  %s5 = ssub.s32 1, %s3
  %s6 = scalar_select 0, %s5, %s3
  loop: start=0, step=1, limit=4
  $region2: #{tpu_custom_call.1} parent=0 // loop_pre_header
    _
  $region3: #{tpu_custom_call.1} parent=0 // loop_header
    %s8 = sphi 0, %s12
    %p9 = scmp.ge.s32.totalorder %s8, 4
    %s15 = sphi 0, %s27
    %s16 = sphi 0, %s23
    %s17 = sphi 0, %s15
    %s18 = sphi 0, %s16
    %s19 = sphi 0, %s17
    %s20 = sphi 0, %s18
    %s30 = sphi 0, %s32
    %s33 = sphi 0, %s30
    %s34 = sphi 0, %s33
    %s50 = sphi 0, %s34
    %s56 = sphi 0, %s58
    %s59 = sphi 0, %s56
    %s60 = sphi 0, %s59
    %s76 = sphi 0, %s60
    %s84 = sphi 0, %s86
    %s87 = sphi 0, %s84
    %s88 = sphi 0, %s87
    %s104 = sphi 0, %s88
  $region4: #{tpu_custom_call.1} parent=0 // loop_header_branch
    %11 = sbr.rel (%p9) target = $region8
  $region5: #{tpu_custom_call.1} parent=0 // loop_body
    %s13 = ssub.s32 %s8, 1
    %s14 = ssub.s32 %s8, 2
    %s21 = sadd.s32 1, %s16
    %p22 = scmp.ge.s32.totalorder %s21, 2
    %s23 = scalar_select %p22, 0, %s21
    %s24 = sadd.s32 1, %s15
    %s25 = scalar_select %p22, %s24, %s15
    %p26 = scmp.ge.s32.totalorder %s25, 1
    %s27 = scalar_select %p26, 0, %s25
    %s28 = ssub.s32 %s15, %s27
    %p29 = scmp.eq.s32.totalorder %s28, 0
    %s31 = sadd.s32 %s30, 1
    %s32 = scalar_select %p29, %s30, %s31
    %p35 = pneg %p29
    %p36 = scmp.eq.s32.totalorder %s8, 1
    %p37 = por %p35, %p36
    %p38 = scmp.ne.s32.totalorder %s30, %s33
    %p39 = scmp.eq.s32.totalorder %s8, 0
    %p40 = por %p38, %p39
    %p41 = scmp.ne.s32.totalorder %s30, %s33
    %p42 = scmp.eq.s32.totalorder %s13, 1
    %p43 = por %p41, %p42
    %p44 = scmp.ne.s32.totalorder %s33, %s34
    %p45 = scmp.eq.s32.totalorder %s13, 0
    %p46 = por %p44, %p45
    %p47 = scmp.ne.s32.totalorder %s33, %s34
    %p48 = scmp.eq.s32.totalorder %s14, 1
    %p49 = por %p47, %p48
    %p51 = scmp.ne.s32.totalorder %s34, %s50
    %p52 = scmp.eq.s32.totalorder %s14, 0
    %p53 = por %p51, %p52
    %s54 = ssub.s32 %s16, %s23
    %p55 = scmp.eq.s32.totalorder %s54, 0
    %s57 = sadd.s32 %s56, 1
    %s58 = scalar_select %p55, %s56, %s57
    %p61 = pneg %p55
    %p62 = scmp.eq.s32.totalorder %s8, 1
    %p63 = por %p61, %p62
    %p64 = scmp.ne.s32.totalorder %s56, %s59
    %p65 = scmp.eq.s32.totalorder %s8, 0
    %p66 = por %p64, %p65
    %p67 = scmp.ne.s32.totalorder %s56, %s59
    %p68 = scmp.eq.s32.totalorder %s13, 1
    %p69 = por %p67, %p68
    %p70 = scmp.ne.s32.totalorder %s59, %s60
    %p71 = scmp.eq.s32.totalorder %s13, 0
    %p72 = por %p70, %p71
    %p73 = scmp.ne.s32.totalorder %s59, %s60
    %p74 = scmp.eq.s32.totalorder %s14, 1
    %p75 = por %p73, %p74
    %p77 = scmp.ne.s32.totalorder %s60, %s76
    %p78 = scmp.eq.s32.totalorder %s14, 0
    %p79 = por %p77, %p78
    %s80 = ssub.s32 %s16, %s23
    %s81 = ssub.s32 %s15, %s27
    %s82 = sor.u32 %s80, %s81
    %p83 = scmp.eq.s32.totalorder %s82, 0
    %s85 = sadd.s32 %s84, 1
    %s86 = scalar_select %p83, %s84, %s85
    %p89 = pneg %p83
    %p90 = scmp.eq.s32.totalorder %s8, 1
    %p91 = por %p89, %p90
    %p92 = scmp.ne.s32.totalorder %s84, %s87
    %p93 = scmp.eq.s32.totalorder %s8, 0
    %p94 = por %p92, %p93
    %p95 = scmp.ne.s32.totalorder %s84, %s87
    %p96 = scmp.eq.s32.totalorder %s13, 1
    %p97 = por %p95, %p96
    %p98 = scmp.ne.s32.totalorder %s87, %s88
    %p99 = scmp.eq.s32.totalorder %s13, 0
    %p100 = por %p98, %p99
    %p101 = scmp.ne.s32.totalorder %s87, %s88
    %p102 = scmp.eq.s32.totalorder %s14, 1
    %p103 = por %p101, %p102
    %p105 = scmp.ne.s32.totalorder %s88, %s104
    %p106 = scmp.eq.s32.totalorder %s14, 0
    %p107 = por %p105, %p106
    %p108 = scmp.le.s32.totalorder 1, %s8
    %p109 = scmp.lt.s32.totalorder %s8, 3
    %p110 = pnand %p108, %p109
    %p111 = pneg %p110
    // Predicated region
    $region9: #{tpu_custom_call.1} parent=5 // pred_check
      _
    $region10: #{tpu_custom_call.1} parent=5 // pred_check_branch
      %113 = sbr.rel (%p110) target = $region12
    $region11: #{tpu_custom_call.1} parent=5 // pred_region
      %s114 = ssub.s32 %s8, 1
      // Predicated region
      $region13: #{tpu_custom_call.1} parent=11 // pred_check
        %p115 = pneg %p46
      $region14: #{tpu_custom_call.1} parent=11 // pred_check_branch
        %117 = sbr.rel (%p115) target = $region16
      $region15: #{tpu_custom_call.1} parent=11 // pred_region
        %s118 = smul.u32 32, %s17
        %p119 = scmp.lt.s32.totalorder %s118, 31
        %s120 = scalar_select %p119, %s118, 31
        %s121 = smul.addr %s120, 2
        %s122 = smul.addr %s121, 4
        %s123 = scalar_lea.vmem %s0, %s122
        %s124 = smul.u32 32, %s17
      $region16: #{tpu_custom_call.1} parent=11 // pred_fallthru
        _
    $region12: #{tpu_custom_call.1} parent=5 // pred_fallthru
      _
    %p125 = scmp.lt.s32.totalorder %s8, 2
    // Predicated region
    $region17: #{tpu_custom_call.1} parent=5 // pred_check
      %p126 = pneg %p125
    $region18: #{tpu_custom_call.1} parent=5 // pred_check_branch
      %128 = sbr.rel (%p126) target = $region20
    $region19: #{tpu_custom_call.1} parent=5 // pred_region
      // Predicated region
      $region21: #{tpu_custom_call.1} parent=19 // pred_check
        %p129 = pneg %p66
      $region22: #{tpu_custom_call.1} parent=19 // pred_check_branch
        %131 = sbr.rel (%p129) target = $region24
      $region23: #{tpu_custom_call.1} parent=19 // pred_region
        %p132 = scmp.lt.s32.totalorder %s16, 1
        %s133 = scalar_select %p132, %s16, 1
        %s134 = smul.addr %s133, 32
        %s135 = smul.addr %s134, 4
        %s136 = scalar_lea.vmem %s1, %s135
      $region24: #{tpu_custom_call.1} parent=19 // pred_fallthru
        _
    $region20: #{tpu_custom_call.1} parent=5 // pred_fallthru
      _
    %p137 = scmp.le.s32.totalorder 1, %s8
    %p138 = scmp.lt.s32.totalorder %s8, 3
    %p139 = pnand %p137, %p138
    %p140 = pneg %p139
    // Predicated region
    $region25: #{tpu_custom_call.1} parent=5 // pred_check
      _
    $region26: #{tpu_custom_call.1} parent=5 // pred_check_branch
      %142 = sbr.rel (%p139) target = $region28
    $region27: #{tpu_custom_call.1} parent=5 // pred_region
      %s143 = ssub.s32 %s8, 1
      %s144 = smul.u32 32, %s17
      %p145 = scmp.lt.s32.totalorder %s144, 31
      %s146 = scalar_select %p145, %s144, 31
      %s147 = smul.addr %s146, 2
      %s148 = smul.addr %s147, 4
      %s149 = scalar_lea.vmem %s0, %s148
      %p150 = pneg %p46
      %p151 = pneg %p43
      %p152 = scmp.lt.s32.totalorder %s18, 1
      %s153 = scalar_select %p152, %s18, 1
      %s154 = smul.addr %s153, 32
      %s155 = smul.addr %s154, 4
      %s156 = scalar_lea.vmem %s1, %s155
      %p157 = pneg %p72
      %p158 = pneg %p69
      %p159 = pneg %p100
      %p160 = pneg %p97
      %s161 = smul.u32 32, %s17
      %p162 = scmp.lt.s32.totalorder %s18, 1
      %s163 = scalar_select %p162, %s18, 1
      %p164 = scmp.lt.s32.totalorder %s161, 31
      %s165 = scalar_select %p164, %s161, 31
      %s166 = smul.addr %s163, 32
      %s167 = sadd.s32 %s165, %s166
      %s168 = smul.addr %s167, 8
      %s169 = scalar_lea.vmem %s2, %s168
      %s170 = smul.u32 32, %s17
      %p171 = scmp.lt.s32.totalorder %s170, 31
      %s172 = scalar_select %p171, %s170, 31
      %s173 = smul.addr %s172, 2
      %s174 = smul.addr %s173, 4
      %s175 = scalar_lea.vmem %s0, %s174
      %s176 = smul.u32 32, %s17
      %p177 = scmp.lt.s32.totalorder %s18, 1
      %s178 = scalar_select %p177, %s18, 1
      %s179 = smul.addr %s178, 32
      %s180 = smul.addr %s179, 4
      %s181 = scalar_lea.vmem %s1, %s180
      %s182 = smul.u32 32, %s17
      %p183 = scmp.lt.s32.totalorder %s18, 1
      %s184 = scalar_select %p183, %s18, 1
      %p185 = scmp.lt.s32.totalorder %s182, 31
      %s186 = scalar_select %p185, %s182, 31
      %s187 = smul.addr %s184, 32
      %s188 = sadd.s32 %s186, %s187
      %s189 = smul.addr %s188, 8
      %s190 = scalar_lea.vmem %s2, %s189
      %s191 = smul.u32 32, %s17
      %v192 = vld [vmem:[%s175] sm:$0xff]
      %v193 = vld [vmem:[%s175 + $0x8] sm:$0xff]
      %v194 = vld [vmem:[%s175 + $0x10] sm:$0xff]
      %v195 = vld [vmem:[%s175 + $0x18] sm:$0xff]
      %v196 = vld [vmem:[%s175 + $0x20] sm:$0xff]
      %v197 = vld [vmem:[%s175 + $0x28] sm:$0xff]
      %v198 = vld [vmem:[%s175 + $0x30] sm:$0xff]
      %v199 = vld [vmem:[%s175 + $0x38] sm:$0xff]
      %v200 = vld [vmem:[%s175 + $0x40] sm:$0xff]
      %v201 = vld [vmem:[%s175 + $0x48] sm:$0xff]
      %v202 = vld [vmem:[%s175 + $0x50] sm:$0xff]
      %v203 = vld [vmem:[%s175 + $0x58] sm:$0xff]
      %v204 = vld [vmem:[%s175 + $0x60] sm:$0xff]
      %v205 = vld [vmem:[%s175 + $0x68] sm:$0xff]
      %v206 = vld [vmem:[%s175 + $0x70] sm:$0xff]
      %v207 = vld [vmem:[%s175 + $0x78] sm:$0xff]
      %v208 = vld [vmem:[%s175 + $0x80] sm:$0xff]
      %v209 = vld [vmem:[%s175 + $0x88] sm:$0xff]
      %v210 = vld [vmem:[%s175 + $0x90] sm:$0xff]
      %v211 = vld [vmem:[%s175 + $0x98] sm:$0xff]
      %v212 = vld [vmem:[%s175 + $0xa0] sm:$0xff]
      %v213 = vld [vmem:[%s175 + $0xa8] sm:$0xff]
      %v214 = vld [vmem:[%s175 + $0xb0] sm:$0xff]
      %v215 = vld [vmem:[%s175 + $0xb8] sm:$0xff]
      %v216 = vld [vmem:[%s175 + $0xc0] sm:$0xff]
      %v217 = vld [vmem:[%s175 + $0xc8] sm:$0xff]
      %v218 = vld [vmem:[%s175 + $0xd0] sm:$0xff]
      %v219 = vld [vmem:[%s175 + $0xd8] sm:$0xff]
      %v220 = vld [vmem:[%s175 + $0xe0] sm:$0xff]
      %v221 = vld [vmem:[%s175 + $0xe8] sm:$0xff]
      %v222 = vld [vmem:[%s175 + $0xf0] sm:$0xff]
      %v223 = vld [vmem:[%s175 + $0xf8] sm:$0xff]
      %v224 = vld [vmem:[%s181] sm:$0xf]
      %v225 = vld [vmem:[%s181 + $0x4] sm:$0xf]
      %v226 = vld [vmem:[%s181 + $0x8] sm:$0xf]
      %v227 = vld [vmem:[%s181 + $0xc] sm:$0xf]
      %v228 = vld [vmem:[%s181 + $0x10] sm:$0xf]
      %v229 = vld [vmem:[%s181 + $0x14] sm:$0xf]
      %v230 = vld [vmem:[%s181 + $0x18] sm:$0xf]
      %v231 = vld [vmem:[%s181 + $0x1c] sm:$0xf]
      %v232 = vld [vmem:[%s181 + $0x20] sm:$0xf]
      %v233 = vld [vmem:[%s181 + $0x24] sm:$0xf]
      %v234 = vld [vmem:[%s181 + $0x28] sm:$0xf]
      %v235 = vld [vmem:[%s181 + $0x2c] sm:$0xf]
      %v236 = vld [vmem:[%s181 + $0x30] sm:$0xf]
      %v237 = vld [vmem:[%s181 + $0x34] sm:$0xf]
      %v238 = vld [vmem:[%s181 + $0x38] sm:$0xf]
      %v239 = vld [vmem:[%s181 + $0x3c] sm:$0xf]
      %v240 = vld [vmem:[%s181 + $0x40] sm:$0xf]
      %v241 = vld [vmem:[%s181 + $0x44] sm:$0xf]
      %v242 = vld [vmem:[%s181 + $0x48] sm:$0xf]
      %v243 = vld [vmem:[%s181 + $0x4c] sm:$0xf]
      %v244 = vld [vmem:[%s181 + $0x50] sm:$0xf]
      %v245 = vld [vmem:[%s181 + $0x54] sm:$0xf]
      %v246 = vld [vmem:[%s181 + $0x58] sm:$0xf]
      %v247 = vld [vmem:[%s181 + $0x5c] sm:$0xf]
      %v248 = vld [vmem:[%s181 + $0x60] sm:$0xf]
      %v249 = vld [vmem:[%s181 + $0x64] sm:$0xf]
      %v250 = vld [vmem:[%s181 + $0x68] sm:$0xf]
      %v251 = vld [vmem:[%s181 + $0x6c] sm:$0xf]
      %v252 = vld [vmem:[%s181 + $0x70] sm:$0xf]
      %v253 = vld [vmem:[%s181 + $0x74] sm:$0xf]
      %v254 = vld [vmem:[%s181 + $0x78] sm:$0xf]
      %v255 = vld [vmem:[%s181 + $0x7c] sm:$0xf]
      %v288 = vunpack.c.l.b16 %v192
      %v289 = vunpack.c.h.b16 %v192
      %v290 = vunpack.c.l.b16 %v193
      %v291 = vunpack.c.h.b16 %v193
      %v292 = vunpack.c.l.b16 %v194
      %v293 = vunpack.c.h.b16 %v194
      %v294 = vunpack.c.l.b16 %v195
      %v295 = vunpack.c.h.b16 %v195
      %v296 = vunpack.c.l.b16 %v196
      %v297 = vunpack.c.h.b16 %v196
      %v298 = vunpack.c.l.b16 %v197
      %v299 = vunpack.c.h.b16 %v197
      %v300 = vunpack.c.l.b16 %v198
      %v301 = vunpack.c.h.b16 %v198
      %v302 = vunpack.c.l.b16 %v199
      %v303 = vunpack.c.h.b16 %v199
      %v304 = vunpack.c.l.b16 %v200
      %v305 = vunpack.c.h.b16 %v200
      %v306 = vunpack.c.l.b16 %v201
      %v307 = vunpack.c.h.b16 %v201
      %v308 = vunpack.c.l.b16 %v202
      %v309 = vunpack.c.h.b16 %v202
      %v310 = vunpack.c.l.b16 %v203
      %v311 = vunpack.c.h.b16 %v203
      %v312 = vunpack.c.l.b16 %v204
      %v313 = vunpack.c.h.b16 %v204
      %v314 = vunpack.c.l.b16 %v205
      %v315 = vunpack.c.h.b16 %v205
      %v316 = vunpack.c.l.b16 %v206
      %v317 = vunpack.c.h.b16 %v206
      %v318 = vunpack.c.l.b16 %v207
      %v319 = vunpack.c.h.b16 %v207
      %v320 = vunpack.c.l.b16 %v208
      %v321 = vunpack.c.h.b16 %v208
      %v322 = vunpack.c.l.b16 %v209
      %v323 = vunpack.c.h.b16 %v209
      %v324 = vunpack.c.l.b16 %v210
      %v325 = vunpack.c.h.b16 %v210
      %v326 = vunpack.c.l.b16 %v211
      %v327 = vunpack.c.h.b16 %v211
      %v328 = vunpack.c.l.b16 %v212
      %v329 = vunpack.c.h.b16 %v212
      %v330 = vunpack.c.l.b16 %v213
      %v331 = vunpack.c.h.b16 %v213
      %v332 = vunpack.c.l.b16 %v214
      %v333 = vunpack.c.h.b16 %v214
      %v334 = vunpack.c.l.b16 %v215
      %v335 = vunpack.c.h.b16 %v215
      %v336 = vunpack.c.l.b16 %v216
      %v337 = vunpack.c.h.b16 %v216
      %v338 = vunpack.c.l.b16 %v217
      %v339 = vunpack.c.h.b16 %v217
      %v340 = vunpack.c.l.b16 %v218
      %v341 = vunpack.c.h.b16 %v218
      %v342 = vunpack.c.l.b16 %v219
      %v343 = vunpack.c.h.b16 %v219
      %v344 = vunpack.c.l.b16 %v220
      %v345 = vunpack.c.h.b16 %v220
      %v346 = vunpack.c.l.b16 %v221
      %v347 = vunpack.c.h.b16 %v221
      %v348 = vunpack.c.l.b16 %v222
      %v349 = vunpack.c.h.b16 %v222
      %v350 = vunpack.c.l.b16 %v223
      %v351 = vunpack.c.h.b16 %v223
      %v352 = vpack.c.b16 %v290, %v288
      %v353 = vpack.c.b16 %v291, %v289
      %v354 = vpack.c.b16 %v294, %v292
      %v355 = vpack.c.b16 %v295, %v293
      %v356 = vpack.c.b16 %v298, %v296
      %v357 = vpack.c.b16 %v299, %v297
      %v358 = vpack.c.b16 %v302, %v300
      %v359 = vpack.c.b16 %v303, %v301
      %v360 = vpack.c.b16 %v306, %v304
      %v361 = vpack.c.b16 %v307, %v305
      %v362 = vpack.c.b16 %v310, %v308
      %v363 = vpack.c.b16 %v311, %v309
      %v364 = vpack.c.b16 %v314, %v312
      %v365 = vpack.c.b16 %v315, %v313
      %v366 = vpack.c.b16 %v318, %v316
      %v367 = vpack.c.b16 %v319, %v317
      %v368 = vpack.c.b16 %v322, %v320
      %v369 = vpack.c.b16 %v323, %v321
      %v370 = vpack.c.b16 %v326, %v324
      %v371 = vpack.c.b16 %v327, %v325
      %v372 = vpack.c.b16 %v330, %v328
      %v373 = vpack.c.b16 %v331, %v329
      %v374 = vpack.c.b16 %v334, %v332
      %v375 = vpack.c.b16 %v335, %v333
      %v376 = vpack.c.b16 %v338, %v336
      %v377 = vpack.c.b16 %v339, %v337
      %v378 = vpack.c.b16 %v342, %v340
      %v379 = vpack.c.b16 %v343, %v341
      %v380 = vpack.c.b16 %v346, %v344
      %v381 = vpack.c.b16 %v347, %v345
      %v382 = vpack.c.b16 %v350, %v348
      %v383 = vpack.c.b16 %v351, %v349
      %v448 = vunpack.c.l.b16 %v224
      %v449 = vunpack.c.l.b16 %v225
      %v450 = vunpack.c.l.b16 %v226
      %v451 = vunpack.c.l.b16 %v227
      %v452 = vunpack.c.l.b16 %v228
      %v453 = vunpack.c.l.b16 %v229
      %v454 = vunpack.c.l.b16 %v230
      %v455 = vunpack.c.l.b16 %v231
      %v456 = vunpack.c.l.b16 %v232
      %v457 = vunpack.c.l.b16 %v233
      %v458 = vunpack.c.l.b16 %v234
      %v459 = vunpack.c.l.b16 %v235
      %v460 = vunpack.c.l.b16 %v236
      %v461 = vunpack.c.l.b16 %v237
      %v462 = vunpack.c.l.b16 %v238
      %v463 = vunpack.c.l.b16 %v239
      %v464 = vunpack.c.l.b16 %v240
      %v465 = vunpack.c.l.b16 %v241
      %v466 = vunpack.c.l.b16 %v242
      %v467 = vunpack.c.l.b16 %v243
      %v468 = vunpack.c.l.b16 %v244
      %v469 = vunpack.c.l.b16 %v245
      %v470 = vunpack.c.l.b16 %v246
      %v471 = vunpack.c.l.b16 %v247
      %v472 = vunpack.c.l.b16 %v248
      %v473 = vunpack.c.l.b16 %v249
      %v474 = vunpack.c.l.b16 %v250
      %v475 = vunpack.c.l.b16 %v251
      %v476 = vunpack.c.l.b16 %v252
      %v477 = vunpack.c.l.b16 %v253
      %v478 = vunpack.c.l.b16 %v254
      %v479 = vunpack.c.l.b16 %v255
      %v480 = vpack.c.b16 %v449, %v448
      %v481 = vpack.c.b16 %v451, %v450
      %v482 = vpack.c.b16 %v453, %v452
      %v483 = vpack.c.b16 %v455, %v454
      %v484 = vpack.c.b16 %v457, %v456
      %v485 = vpack.c.b16 %v459, %v458
      %v486 = vpack.c.b16 %v461, %v460
      %v487 = vpack.c.b16 %v463, %v462
      %v488 = vpack.c.b16 %v465, %v464
      %v489 = vpack.c.b16 %v467, %v466
      %v490 = vpack.c.b16 %v469, %v468
      %v491 = vpack.c.b16 %v471, %v470
      %v492 = vpack.c.b16 %v473, %v472
      %v493 = vpack.c.b16 %v475, %v474
      %v494 = vpack.c.b16 %v477, %v476
      %v495 = vpack.c.b16 %v479, %v478
      %512 = vmatpush.bf16.msra.mxu0 %v487
      %513 = vmatpush.bf16.msra.mxu0 %v486
      %514 = vmatpush.bf16.msra.mxu0 %v485
      %515 = vmatpush.bf16.msra.mxu0 %v484
      %516 = vmatpush.bf16.msra.mxu0 %v483
      %517 = vmatpush.bf16.msra.mxu0 %v482
      %518 = vmatpush.bf16.msra.mxu0 %v481
      %519 = vmatpush.bf16.msra.mxu0 %v480
      %520 = vmatmul.bf16.gmra.mxu0 %v352
      %v521 = vpop.f32.mrf.mxu0
      %v522 = vadd.f32 0.0, %v521
      %v523 = vpop.f32.mrf.mxu0
      %v524 = vadd.f32 0.0, %v523
      %525 = vmatmul.bf16.gmra.mxu0 %v354
      %v526 = vpop.f32.mrf.mxu0
      %v527 = vadd.f32 0.0, %v526
      %v528 = vpop.f32.mrf.mxu0
      %v529 = vadd.f32 0.0, %v528
      %530 = vmatmul.bf16.gmra.mxu0 %v356
      %v531 = vpop.f32.mrf.mxu0
      %v532 = vadd.f32 0.0, %v531
      %v533 = vpop.f32.mrf.mxu0
      %v534 = vadd.f32 0.0, %v533
      %535 = vmatmul.bf16.gmra.mxu0 %v358
      %v536 = vpop.f32.mrf.mxu0
      %v537 = vadd.f32 0.0, %v536
      %v538 = vpop.f32.mrf.mxu0
      %v539 = vadd.f32 0.0, %v538
      %540 = vmatmul.bf16.gmra.mxu0 %v360
      %v541 = vpop.f32.mrf.mxu0
      %v542 = vadd.f32 0.0, %v541
      %v543 = vpop.f32.mrf.mxu0
      %v544 = vadd.f32 0.0, %v543
      %545 = vmatmul.bf16.gmra.mxu0 %v362
      %v546 = vpop.f32.mrf.mxu0
      %v547 = vadd.f32 0.0, %v546
      %v548 = vpop.f32.mrf.mxu0
      %v549 = vadd.f32 0.0, %v548
      %550 = vmatmul.bf16.gmra.mxu0 %v364
      %v551 = vpop.f32.mrf.mxu0
      %v552 = vadd.f32 0.0, %v551
      %v553 = vpop.f32.mrf.mxu0
      %v554 = vadd.f32 0.0, %v553
      %555 = vmatmul.bf16.gmra.mxu0 %v366
      %v556 = vpop.f32.mrf.mxu0
      %v557 = vadd.f32 0.0, %v556
      %v558 = vpop.f32.mrf.mxu0
      %v559 = vadd.f32 0.0, %v558
      %560 = vmatmul.bf16.gmra.mxu0 %v368
      %v561 = vpop.f32.mrf.mxu0
      %v562 = vadd.f32 0.0, %v561
      %v563 = vpop.f32.mrf.mxu0
      %v564 = vadd.f32 0.0, %v563
      %565 = vmatmul.bf16.gmra.mxu0 %v370
      %v566 = vpop.f32.mrf.mxu0
      %v567 = vadd.f32 0.0, %v566
      %v568 = vpop.f32.mrf.mxu0
      %v569 = vadd.f32 0.0, %v568
      %570 = vmatmul.bf16.gmra.mxu0 %v372
      %v571 = vpop.f32.mrf.mxu0
      %v572 = vadd.f32 0.0, %v571
      %v573 = vpop.f32.mrf.mxu0
      %v574 = vadd.f32 0.0, %v573
      %575 = vmatmul.bf16.gmra.mxu0 %v374
      %v576 = vpop.f32.mrf.mxu0
      %v577 = vadd.f32 0.0, %v576
      %v578 = vpop.f32.mrf.mxu0
      %v579 = vadd.f32 0.0, %v578
      %580 = vmatmul.bf16.gmra.mxu0 %v376
      %v581 = vpop.f32.mrf.mxu0
      %v582 = vadd.f32 0.0, %v581
      %v583 = vpop.f32.mrf.mxu0
      %v584 = vadd.f32 0.0, %v583
      %585 = vmatmul.bf16.gmra.mxu0 %v378
      %v586 = vpop.f32.mrf.mxu0
      %v587 = vadd.f32 0.0, %v586
      %v588 = vpop.f32.mrf.mxu0
      %v589 = vadd.f32 0.0, %v588
      %590 = vmatmul.bf16.gmra.mxu0 %v380
      %v591 = vpop.f32.mrf.mxu0
      %v592 = vadd.f32 0.0, %v591
      %v593 = vpop.f32.mrf.mxu0
      %v594 = vadd.f32 0.0, %v593
      %595 = vmatmul.bf16.gmra.mxu0 %v382
      %v596 = vpop.f32.mrf.mxu0
      %v597 = vadd.f32 0.0, %v596
      %v598 = vpop.f32.mrf.mxu0
      %v599 = vadd.f32 0.0, %v598
      %600 = vdwg.mxu0
      %601 = vmatpush.bf16.msra.mxu0 %v495
      %602 = vmatpush.bf16.msra.mxu0 %v494
      %603 = vmatpush.bf16.msra.mxu0 %v493
      %604 = vmatpush.bf16.msra.mxu0 %v492
      %605 = vmatpush.bf16.msra.mxu0 %v491
      %606 = vmatpush.bf16.msra.mxu0 %v490
      %607 = vmatpush.bf16.msra.mxu0 %v489
      %608 = vmatpush.bf16.msra.mxu0 %v488
      %609 = vmatmul.bf16.gmra.mxu0 %v353
      %v610 = vpop.f32.mrf.mxu0
      %v611 = vadd.f32 %v522, %v610
      %v612 = vpop.f32.mrf.mxu0
      %v613 = vadd.f32 %v524, %v612
      %614 = vmatmul.bf16.gmra.mxu0 %v355
      %v615 = vpop.f32.mrf.mxu0
      %v616 = vadd.f32 %v527, %v615
      %v617 = vpop.f32.mrf.mxu0
      %v618 = vadd.f32 %v529, %v617
      %619 = vmatmul.bf16.gmra.mxu0 %v357
      %v620 = vpop.f32.mrf.mxu0
      %v621 = vadd.f32 %v532, %v620
      %v622 = vpop.f32.mrf.mxu0
      %v623 = vadd.f32 %v534, %v622
      %624 = vmatmul.bf16.gmra.mxu0 %v359
      %v625 = vpop.f32.mrf.mxu0
      %v626 = vadd.f32 %v537, %v625
      %v627 = vpop.f32.mrf.mxu0
      %v628 = vadd.f32 %v539, %v627
      %629 = vmatmul.bf16.gmra.mxu0 %v361
      %v630 = vpop.f32.mrf.mxu0
      %v631 = vadd.f32 %v542, %v630
      %v632 = vpop.f32.mrf.mxu0
      %v633 = vadd.f32 %v544, %v632
      %634 = vmatmul.bf16.gmra.mxu0 %v363
      %v635 = vpop.f32.mrf.mxu0
      %v636 = vadd.f32 %v547, %v635
      %v637 = vpop.f32.mrf.mxu0
      %v638 = vadd.f32 %v549, %v637
      %639 = vmatmul.bf16.gmra.mxu0 %v365
      %v640 = vpop.f32.mrf.mxu0
      %v641 = vadd.f32 %v552, %v640
      %v642 = vpop.f32.mrf.mxu0
      %v643 = vadd.f32 %v554, %v642
      %644 = vmatmul.bf16.gmra.mxu0 %v367
      %v645 = vpop.f32.mrf.mxu0
      %v646 = vadd.f32 %v557, %v645
      %v647 = vpop.f32.mrf.mxu0
      %v648 = vadd.f32 %v559, %v647
      %649 = vmatmul.bf16.gmra.mxu0 %v369
      %v650 = vpop.f32.mrf.mxu0
      %v651 = vadd.f32 %v562, %v650
      %v652 = vpop.f32.mrf.mxu0
      %v653 = vadd.f32 %v564, %v652
      %654 = vmatmul.bf16.gmra.mxu0 %v371
      %v655 = vpop.f32.mrf.mxu0
      %v656 = vadd.f32 %v567, %v655
      %v657 = vpop.f32.mrf.mxu0
      %v658 = vadd.f32 %v569, %v657
      %659 = vmatmul.bf16.gmra.mxu0 %v373
      %v660 = vpop.f32.mrf.mxu0
      %v661 = vadd.f32 %v572, %v660
      %v662 = vpop.f32.mrf.mxu0
      %v663 = vadd.f32 %v574, %v662
      %664 = vmatmul.bf16.gmra.mxu0 %v375
      %v665 = vpop.f32.mrf.mxu0
      %v666 = vadd.f32 %v577, %v665
      %v667 = vpop.f32.mrf.mxu0
      %v668 = vadd.f32 %v579, %v667
      %669 = vmatmul.bf16.gmra.mxu0 %v377
      %v670 = vpop.f32.mrf.mxu0
      %v671 = vadd.f32 %v582, %v670
      %v672 = vpop.f32.mrf.mxu0
      %v673 = vadd.f32 %v584, %v672
      %674 = vmatmul.bf16.gmra.mxu0 %v379
      %v675 = vpop.f32.mrf.mxu0
      %v676 = vadd.f32 %v587, %v675
      %v677 = vpop.f32.mrf.mxu0
      %v678 = vadd.f32 %v589, %v677
      %679 = vmatmul.bf16.gmra.mxu0 %v381
      %v680 = vpop.f32.mrf.mxu0
      %v681 = vadd.f32 %v592, %v680
      %v682 = vpop.f32.mrf.mxu0
      %v683 = vadd.f32 %v594, %v682
      %684 = vmatmul.bf16.gmra.mxu0 %v383
      %v685 = vpop.f32.mrf.mxu0
      %v686 = vadd.f32 %v597, %v685
      %v687 = vpop.f32.mrf.mxu0
      %v688 = vadd.f32 %v599, %v687
      %689 = vdwg.mxu0
      %vm690 = vcmask 523264
      %691 = vst.msk [vmem:[%s190] sm:$0xff] %vm690, %v611
      %692 = vst.msk [vmem:[%s190 + $0x8] sm:$0xff] %vm690, %v613
      %693 = vst.msk [vmem:[%s190 + $0x10] sm:$0xff] %vm690, %v616
      %694 = vst.msk [vmem:[%s190 + $0x18] sm:$0xff] %vm690, %v618
      %695 = vst.msk [vmem:[%s190 + $0x20] sm:$0xff] %vm690, %v621
      %696 = vst.msk [vmem:[%s190 + $0x28] sm:$0xff] %vm690, %v623
      %697 = vst.msk [vmem:[%s190 + $0x30] sm:$0xff] %vm690, %v626
      %698 = vst.msk [vmem:[%s190 + $0x38] sm:$0xff] %vm690, %v628
      %699 = vst.msk [vmem:[%s190 + $0x40] sm:$0xff] %vm690, %v631
      %700 = vst.msk [vmem:[%s190 + $0x48] sm:$0xff] %vm690, %v633
      %701 = vst.msk [vmem:[%s190 + $0x50] sm:$0xff] %vm690, %v636
      %702 = vst.msk [vmem:[%s190 + $0x58] sm:$0xff] %vm690, %v638
      %703 = vst.msk [vmem:[%s190 + $0x60] sm:$0xff] %vm690, %v641
      %704 = vst.msk [vmem:[%s190 + $0x68] sm:$0xff] %vm690, %v643
      %705 = vst.msk [vmem:[%s190 + $0x70] sm:$0xff] %vm690, %v646
      %706 = vst.msk [vmem:[%s190 + $0x78] sm:$0xff] %vm690, %v648
      %707 = vst.msk [vmem:[%s190 + $0x80] sm:$0xff] %vm690, %v651
      %708 = vst.msk [vmem:[%s190 + $0x88] sm:$0xff] %vm690, %v653
      %709 = vst.msk [vmem:[%s190 + $0x90] sm:$0xff] %vm690, %v656
      %710 = vst.msk [vmem:[%s190 + $0x98] sm:$0xff] %vm690, %v658
      %711 = vst.msk [vmem:[%s190 + $0xa0] sm:$0xff] %vm690, %v661
      %712 = vst.msk [vmem:[%s190 + $0xa8] sm:$0xff] %vm690, %v663
      %713 = vst.msk [vmem:[%s190 + $0xb0] sm:$0xff] %vm690, %v666
      %714 = vst.msk [vmem:[%s190 + $0xb8] sm:$0xff] %vm690, %v668
      %715 = vst.msk [vmem:[%s190 + $0xc0] sm:$0xff] %vm690, %v671
      %716 = vst.msk [vmem:[%s190 + $0xc8] sm:$0xff] %vm690, %v673
      %717 = vst.msk [vmem:[%s190 + $0xd0] sm:$0xff] %vm690, %v676
      %718 = vst.msk [vmem:[%s190 + $0xd8] sm:$0xff] %vm690, %v678
      %719 = vst.msk [vmem:[%s190 + $0xe0] sm:$0xff] %vm690, %v681
      %720 = vst.msk [vmem:[%s190 + $0xe8] sm:$0xff] %vm690, %v683
      %721 = vst.msk [vmem:[%s190 + $0xf0] sm:$0xff] %vm690, %v686
      %722 = vst.msk [vmem:[%s190 + $0xf8] sm:$0xff] %vm690, %v688
      %s723 = smul.u32 32, %s17
      %p724 = scmp.lt.s32.totalorder %s18, 1
      %s725 = scalar_select %p724, %s18, 1
      %p726 = scmp.lt.s32.totalorder %s723, 31
      %s727 = scalar_select %p726, %s723, 31
      %s728 = smul.addr %s725, 32
      %s729 = sadd.s32 %s727, %s728
      %s730 = smul.addr %s729, 8
      %s731 = scalar_lea.vmem %s2, %s730
      // Predicated region
      $region29: #{tpu_custom_call.1} parent=27 // pred_check
        %p732 = pneg %p97
      $region30: #{tpu_custom_call.1} parent=27 // pred_check_branch
        %734 = sbr.rel (%p732) target = $region32
      $region31: #{tpu_custom_call.1} parent=27 // pred_region
        %s735 = smul.u32 32, %s17
      $region32: #{tpu_custom_call.1} parent=27 // pred_fallthru
        _
    $region28: #{tpu_custom_call.1} parent=5 // pred_fallthru
      _
    %p736 = scmp.le.s32.totalorder 2, %s8
    // Predicated region
    $region33: #{tpu_custom_call.1} parent=5 // pred_check
      %p737 = pneg %p736
    $region34: #{tpu_custom_call.1} parent=5 // pred_check_branch
      %739 = sbr.rel (%p737) target = $region36
    $region35: #{tpu_custom_call.1} parent=5 // pred_region
      %s740 = ssub.s32 %s8, 2
      // Predicated region
      $region37: #{tpu_custom_call.1} parent=35 // pred_check
        %p741 = pneg %p103
      $region38: #{tpu_custom_call.1} parent=35 // pred_check_branch
        %743 = sbr.rel (%p741) target = $region40
      $region39: #{tpu_custom_call.1} parent=35 // pred_region
        %s744 = smul.u32 32, %s19
        %p745 = scmp.lt.s32.totalorder %s20, 1
        %s746 = scalar_select %p745, %s20, 1
        %p747 = scmp.lt.s32.totalorder %s744, 31
        %s748 = scalar_select %p747, %s744, 31
        %s749 = smul.addr %s746, 32
        %s750 = sadd.s32 %s748, %s749
        %s751 = smul.addr %s750, 8
        %s752 = scalar_lea.vmem %s2, %s751
      $region40: #{tpu_custom_call.1} parent=35 // pred_fallthru
        _
    $region36: #{tpu_custom_call.1} parent=5 // pred_fallthru
      _
  $region6: #{tpu_custom_call.1} parent=0 // loop_footer
    %s12 = sadd.s32 1, %s8
  $region7: #{tpu_custom_call.1} parent=0 // loop_footer_branch
    %7 = sbr.rel target = $region3
  $region8: #{tpu_custom_call.1} parent=0 // loop_exit
    _

</llo_original>
